<compile_context>
chip_gen: v7x
topology: tpu7x:2x2x1
jax: 0.10.0
libtpu: 0.0.40
codegen_flags: <defaults>
</compile_context>

<pallas_src>
import jax
import jax.numpy as jnp
from jax.experimental import pallas as pl
from jax.experimental.pallas import tpu as pltpu


def _make_stats_kernel(labels_mode, tiles_per_p, thw, valid_hw):
    """Builds the reduction kernel.

    x_ref   : (B, C, THW) logits tile
    t_ref   : (B, THW) int32 labels  (labels_mode)  or  (B, C, THW) float target
    out_ref : (5, C, THW) f32 accumulator, resident across the reduction axis:
        [0] sum_b p*g             (softmax prob * target)
        [1] sum_b p
        [2] sum_b g
        [3] sum_b sigmoid(p)*g    (MCCLoss re-applies sigmoid, as in torch)
        [4] sum_b sigmoid(p)
    """

    def kernel(x_ref, t_ref, out_ref):
        k = pl.program_id(1)

        @pl.when(k == 0)
        def _():
            out_ref[...] = jnp.zeros_like(out_ref)

        x = x_ref[...].astype(jnp.float32)                     # (B, C, THW)

        if labels_mode:
            lab = t_ref[...]                                   # (B, THW) int32
            cls = jax.lax.broadcasted_iota(jnp.int32, x.shape, 1)
            g = (lab[:, None, :] == cls).astype(jnp.float32)   # in-register one-hot
        else:
            g = t_ref[...].astype(jnp.float32)                 # (B, C, THW)

        # softmax over the channel axis (dim=1 of NCHW); one EUP reciprocal
        # instead of C divides.
        m = jnp.max(x, axis=1, keepdims=True)
        e = jnp.exp(x - m)
        denom = jnp.sum(e, axis=1, keepdims=True)
        p = e * pl.reciprocal(denom, approx=True)

        # MCCLoss applies sigmoid to its y_pred, which here is already a softmax
        # probability (mirrors the torch code exactly).
        s = jax.nn.sigmoid(p)

        if valid_hw is not None:
            # Mask out padded lanes (g is already zero there).
            pid = pl.program_id(0)
            off = (pid * tiles_per_p + k) * thw
            lane = jax.lax.broadcasted_iota(jnp.int32, (1, 1, thw), 2)
            mask = ((off + lane) < valid_hw).astype(jnp.float32)
            p = p * mask
            s = s * mask

        out_ref[0] += jnp.sum(p * g, axis=0)
        out_ref[1] += jnp.sum(p, axis=0)
        out_ref[2] += jnp.sum(g, axis=0)
        out_ref[3] += jnp.sum(s * g, axis=0)
        out_ref[4] += jnp.sum(s, axis=0)

    return kernel


def _pick_tile(hw, b, c, x_bytes, tgt_lane_bytes,
               budget_bytes=16 << 20, max_lanes=8192):
    """Largest spatial tile (multiple of 128, divides hw) within a VMEM budget."""
    per_lane = 2 * (b * c * x_bytes + tgt_lane_bytes)   # double-buffered inputs
    per_lane += 2 * (5 * c * 4)                         # resident accumulator (x2 margin)
    per_lane += 8 * b * c * 4                           # in-flight f32 intermediates
    cap = max(128, min(max_lanes, (budget_bytes // per_lane) // 128 * 128))
    for mult in range(cap // 128, 0, -1):
        cand = mult * 128
        if hw % cand == 0:
            return cand
    return 128


def _class_stats(x_flat, tgt, labels_mode, valid_hw):
    B, C, HWp = x_flat.shape
    tgt_lane_bytes = B * 4 if labels_mode else B * C * tgt.dtype.itemsize
    thw = _pick_tile(HWp, B, C, x_flat.dtype.itemsize, tgt_lane_bytes)
    num_tiles = HWp // thw
    # Leading parallel axis: lets Mosaic use both TensorCores on v7x.
    P = 2 if (num_tiles >= 2 and num_tiles % 2 == 0) else 1
    tiles_per_p = num_tiles // P

    kernel = _make_stats_kernel(labels_mode, tiles_per_p, thw, valid_hw)

    if labels_mode:
        t_spec = pl.BlockSpec((B, thw), lambda p, k: (0, p * tiles_per_p + k))
    else:
        t_spec = pl.BlockSpec((B, C, thw), lambda p, k: (0, 0, p * tiles_per_p + k))

    return pl.pallas_call(
        kernel,
        out_shape=jax.ShapeDtypeStruct((P, 5, C, thw), jnp.float32),
        grid_spec=pltpu.PrefetchScalarGridSpec(
            num_scalar_prefetch=0,
            grid=(P, tiles_per_p),
            in_specs=[
                pl.BlockSpec((B, C, thw), lambda p, k: (0, 0, p * tiles_per_p + k)),
                t_spec,
            ],
            out_specs=pl.BlockSpec((None, 5, C, thw), lambda p, k: (p, 0, 0, 0)),
        ),
        compiler_params=pltpu.CompilerParams(
            dimension_semantics=("parallel", "arbitrary"),
            vmem_limit_bytes=32 << 20,
        ),
    )(x_flat, tgt)


def jaccard_mcc_loss(logits, target, weights=None, f_eps=1e-7, mcc_eps=1e-5):
    """Forward pass of JaccardMCCLoss.

    logits : (B, C, H, W) float logits.
    target : (B, C, H, W) one-hot / soft float target (module convention) or
             (B, H, W) integer class labels.
    weights: optional (>=C,) float weights; defaults to torch.ones(100) as in __init__.
    """
    B, C, H, W = logits.shape
    HW = H * W

    x_flat = logits.reshape(B, C, HW)

    labels_mode = target.ndim == 3
    if labels_mode:
        tgt = target.astype(jnp.int32).reshape(B, HW)
    else:
        tgt = target.reshape(B, C, HW)

    pad = (-HW) % 128
    if pad:
        x_flat = jnp.pad(x_flat, ((0, 0), (0, 0), (0, pad)))
        if labels_mode:
            tgt = jnp.pad(tgt, ((0, 0), (0, pad)), constant_values=-1)
        else:
            tgt = jnp.pad(tgt, ((0, 0), (0, 0), (0, pad)))

    stats = _class_stats(x_flat, tgt, labels_mode, HW if pad else None)  # (P,5,C,thw)
    sums = jnp.sum(stats, axis=(0, 3))                                   # (5, C) glue
    sum_pg, sum_p, sum_g, sum_sg, sum_s = sums
    n = jnp.float32(B * H * W)

    if weights is None:
        weights = jnp.ones((100,), jnp.float32)   # deterministic, matches torch.ones(100)
    weights = jnp.asarray(weights, jnp.float32)
    w = weights[1:C]

    # TODO(synk): metrics.fscore is not defined in the source; assuming the
    # standard segmentation_models_pytorch f_score (dice) with beta=1, eps=1e-7.
    tp_f = sum_pg[1:]
    fp_f = sum_p[1:] - tp_f
    fn_f = sum_g[1:] - tp_f
    fscore = (2.0 * tp_f + f_eps) / (2.0 * tp_f + fn_f + fp_f + f_eps)

    # MCCLoss on (sigmoid of) the per-class softmax probability.
    tp = sum_sg[1:] + mcc_eps
    tn = (n - sum_s[1:] - sum_g[1:] + sum_sg[1:]) + mcc_eps
    fp = (sum_s[1:] - sum_sg[1:]) + mcc_eps
    fn = (sum_g[1:] - sum_sg[1:]) + mcc_eps
    num = tp * tn - fp * fn
    den = jnp.sqrt((tp + fp) * (tp + fn) * (tn + fp) * (tn + fn))
    mcc_loss = 1.0 - num / den

    return jnp.sum((1.0 - fscore) * w + mcc_loss * w)


if __name__ == "__main__":
    key = jax.random.PRNGKey(0)
    k1, k2 = jax.random.split(key)

    B, C, H, W = 2, 4, 16, 16
    logits = jax.random.normal(k1, (B, C, H, W), dtype=jnp.float32)

    # One-hot target per pixel (NCHW), deterministic — matches the module's interface.
    labels = jax.random.randint(k2, (B, H, W), 0, C)
    target = jax.nn.one_hot(labels, C, axis=1, dtype=jnp.float32)  # (B, C, H, W)

    loss = jax.jit(jaccard_mcc_loss)(logits, target)
    jax.block_until_ready(loss)
    assert loss.shape == () and bool(jnp.isfinite(loss))
    print("KERNEL_OK")
</pallas_src>

<mosaic_0001>
module attributes {stable_mosaic.version = 11 : i64} {
  func.func @kernel(%arg0: i32, %arg1: i32, %arg2: memref<2x4x256xf32, #tpu.memory_space<vmem>>, %arg3: memref<2x4x256xf32, #tpu.memory_space<vmem>>, %arg4: memref<1x5x4x256xf32, #tpu.memory_space<vmem>>) attributes {dimension_semantics = [#tpu.dimension_semantics<parallel>, #tpu.dimension_semantics<arbitrary>], iteration_bounds = array<i64: 1, 1>, scalar_prefetch = 0 : i64, scratch_operands = 0 : i64, tpu.core_type = #tpu.core_type<tc>, window_params = [{transform_indices = @transform_0, window_bounds = array<i64: 2, 4, 256>}, {transform_indices = @transform_1, window_bounds = array<i64: 2, 4, 256>}, {transform_indices = @transform_2, window_bounds = array<i64: 1, 5, 4, 256>}]} {
    %c0_i32 = arith.constant 0 : i32
    %0 = arith.cmpi eq, %arg1, %c0_i32 : i32
    %1 = arith.extui %0 : i1 to i32
    %c0_i32_0 = arith.constant 0 : i32
    %2 = arith.cmpi ne, %1, %c0_i32_0 : i32
    scf.if %2 {
      %cst_49 = arith.constant 0.000000e+00 : f32
      %57 = vector.broadcast %cst_49 : f32 to vector<5x4x256xf32>
      %c0_50 = arith.constant 0 : index
      %c0_51 = arith.constant 0 : index
      %c0_52 = arith.constant 0 : index
      %c0_53 = arith.constant 0 : index
      %58 = vector.load %arg4[%c0_50, %c0_51, %c0_52, %c0_53] : memref<1x5x4x256xf32, #tpu.memory_space<vmem>>, vector<1x5x4x256xf32>
      %59 = vector.shape_cast %58 : vector<1x5x4x256xf32> to vector<5x4x256xf32>
      %60 = vector.shape_cast %57 : vector<5x4x256xf32> to vector<1x5x4x256xf32>
      tpu.vector_store %arg4[%c0_50, %c0_51, %c0_52, %c0_53], %60 {strides = array<i32>} : memref<1x5x4x256xf32, #tpu.memory_space<vmem>>, vector<1x5x4x256xf32>,
    } else {
    }
    %c0 = arith.constant 0 : index
    %c0_1 = arith.constant 0 : index
    %c0_2 = arith.constant 0 : index
    %3 = vector.load %arg2[%c0, %c0_1, %c0_2] : memref<2x4x256xf32, #tpu.memory_space<vmem>>, vector<2x4x256xf32>
    %c0_3 = arith.constant 0 : index
    %c0_4 = arith.constant 0 : index
    %c0_5 = arith.constant 0 : index
    %4 = vector.load %arg3[%c0_3, %c0_4, %c0_5] : memref<2x4x256xf32, #tpu.memory_space<vmem>>, vector<2x4x256xf32>
    %cst = arith.constant dense<0xFF800000> : vector<2x256xf32>
    %5 = vector.multi_reduction <maximumf>, %3, %cst [1] : vector<2x4x256xf32> to vector<2x256xf32>
    %6 = vector.shape_cast %5 : vector<2x256xf32> to vector<2x1x256xf32>
    %7 = vector.broadcast %6 : vector<2x1x256xf32> to vector<2x4x256xf32>
    %8 = arith.subf %3, %7 : vector<2x4x256xf32>
    %9 = math.exp %8 : vector<2x4x256xf32>
    %cst_6 = arith.constant dense<0.000000e+00> : vector<2x256xf32>
    %10 = vector.multi_reduction <add>, %9, %cst_6 [1] : vector<2x4x256xf32> to vector<2x256xf32>
    %11 = vector.shape_cast %10 : vector<2x256xf32> to vector<2x1x256xf32>
    %12 = tpu.reciprocal %11 {approx = true} : vector<2x1x256xf32> -> vector<2x1x256xf32>
    %13 = vector.broadcast %12 : vector<2x1x256xf32> to vector<2x4x256xf32>
    %14 = arith.mulf %9, %13 : vector<2x4x256xf32>
    %15 = arith.negf %14 : vector<2x4x256xf32>
    %16 = math.exp %15 : vector<2x4x256xf32>
    %cst_7 = arith.constant 1.000000e+00 : f32
    %17 = vector.broadcast %cst_7 : f32 to vector<2x4x256xf32>
    %18 = arith.addf %17, %16 : vector<2x4x256xf32>
    %19 = arith.divf %17, %18 : vector<2x4x256xf32>
    %c0_8 = arith.constant 0 : index
    %c0_9 = arith.constant 0 : index
    %c0_10 = arith.constant 0 : index
    %c0_11 = arith.constant 0 : index
    %20 = vector.load %arg4[%c0_8, %c0_9, %c0_10, %c0_11] : memref<1x5x4x256xf32, #tpu.memory_space<vmem>>, vector<1x1x4x256xf32>
    %21 = vector.shape_cast %20 : vector<1x1x4x256xf32> to vector<4x256xf32>
    %22 = arith.mulf %14, %4 : vector<2x4x256xf32>
    %cst_12 = arith.constant dense<0.000000e+00> : vector<4x256xf32>
    %23 = vector.multi_reduction <add>, %22, %cst_12 [0] : vector<2x4x256xf32> to vector<4x256xf32>
    %24 = arith.addf %21, %23 : vector<4x256xf32>
    %c0_13 = arith.constant 0 : index
    %c0_14 = arith.constant 0 : index
    %c0_15 = arith.constant 0 : index
    %c0_16 = arith.constant 0 : index
    %25 = vector.load %arg4[%c0_13, %c0_14, %c0_15, %c0_16] : memref<1x5x4x256xf32, #tpu.memory_space<vmem>>, vector<1x1x4x256xf32>
    %26 = vector.shape_cast %25 : vector<1x1x4x256xf32> to vector<4x256xf32>
    %27 = vector.shape_cast %24 : vector<4x256xf32> to vector<1x1x4x256xf32>
    tpu.vector_store %arg4[%c0_13, %c0_14, %c0_15, %c0_16], %27 {strides = array<i32>} : memref<1x5x4x256xf32, #tpu.memory_space<vmem>>, vector<1x1x4x256xf32>,
    %c0_17 = arith.constant 0 : index
    %c1 = arith.constant 1 : index
    %c0_18 = arith.constant 0 : index
    %c0_19 = arith.constant 0 : index
    %28 = vector.load %arg4[%c0_17, %c1, %c0_18, %c0_19] : memref<1x5x4x256xf32, #tpu.memory_space<vmem>>, vector<1x1x4x256xf32>
    %29 = vector.shape_cast %28 : vector<1x1x4x256xf32> to vector<4x256xf32>
    %cst_20 = arith.constant dense<0.000000e+00> : vector<4x256xf32>
    %30 = vector.multi_reduction <add>, %14, %cst_20 [0] : vector<2x4x256xf32> to vector<4x256xf32>
    %31 = arith.addf %29, %30 : vector<4x256xf32>
    %c0_21 = arith.constant 0 : index
    %c1_22 = arith.constant 1 : index
    %c0_23 = arith.constant 0 : index
    %c0_24 = arith.constant 0 : index
    %32 = vector.load %arg4[%c0_21, %c1_22, %c0_23, %c0_24] : memref<1x5x4x256xf32, #tpu.memory_space<vmem>>, vector<1x1x4x256xf32>
    %33 = vector.shape_cast %32 : vector<1x1x4x256xf32> to vector<4x256xf32>
    %34 = vector.shape_cast %31 : vector<4x256xf32> to vector<1x1x4x256xf32>
    tpu.vector_store %arg4[%c0_21, %c1_22, %c0_23, %c0_24], %34 {strides = array<i32>} : memref<1x5x4x256xf32, #tpu.memory_space<vmem>>, vector<1x1x4x256xf32>,
    %c0_25 = arith.constant 0 : index
    %c2 = arith.constant 2 : index
    %c0_26 = arith.constant 0 : index
    %c0_27 = arith.constant 0 : index
    %35 = vector.load %arg4[%c0_25, %c2, %c0_26, %c0_27] : memref<1x5x4x256xf32, #tpu.memory_space<vmem>>, vector<1x1x4x256xf32>
    %36 = vector.shape_cast %35 : vector<1x1x4x256xf32> to vector<4x256xf32>
    %cst_28 = arith.constant dense<0.000000e+00> : vector<4x256xf32>
    %37 = vector.multi_reduction <add>, %4, %cst_28 [0] : vector<2x4x256xf32> to vector<4x256xf32>
    %38 = arith.addf %36, %37 : vector<4x256xf32>
    %c0_29 = arith.constant 0 : index
    %c2_30 = arith.constant 2 : index
    %c0_31 = arith.constant 0 : index
    %c0_32 = arith.constant 0 : index
    %39 = vector.load %arg4[%c0_29, %c2_30, %c0_31, %c0_32] : memref<1x5x4x256xf32, #tpu.memory_space<vmem>>, vector<1x1x4x256xf32>
    %40 = vector.shape_cast %39 : vector<1x1x4x256xf32> to vector<4x256xf32>
    %41 = vector.shape_cast %38 : vector<4x256xf32> to vector<1x1x4x256xf32>
    tpu.vector_store %arg4[%c0_29, %c2_30, %c0_31, %c0_32], %41 {strides = array<i32>} : memref<1x5x4x256xf32, #tpu.memory_space<vmem>>, vector<1x1x4x256xf32>,
    %c0_33 = arith.constant 0 : index
    %c3 = arith.constant 3 : index
    %c0_34 = arith.constant 0 : index
    %c0_35 = arith.constant 0 : index
    %42 = vector.load %arg4[%c0_33, %c3, %c0_34, %c0_35] : memref<1x5x4x256xf32, #tpu.memory_space<vmem>>, vector<1x1x4x256xf32>
    %43 = vector.shape_cast %42 : vector<1x1x4x256xf32> to vector<4x256xf32>
    %44 = arith.mulf %19, %4 : vector<2x4x256xf32>
    %cst_36 = arith.constant dense<0.000000e+00> : vector<4x256xf32>
    %45 = vector.multi_reduction <add>, %44, %cst_36 [0] : vector<2x4x256xf32> to vector<4x256xf32>
    %46 = arith.addf %43, %45 : vector<4x256xf32>
    %c0_37 = arith.constant 0 : index
    %c3_38 = arith.constant 3 : index
    %c0_39 = arith.constant 0 : index
    %c0_40 = arith.constant 0 : index
    %47 = vector.load %arg4[%c0_37, %c3_38, %c0_39, %c0_40] : memref<1x5x4x256xf32, #tpu.memory_space<vmem>>, vector<1x1x4x256xf32>
    %48 = vector.shape_cast %47 : vector<1x1x4x256xf32> to vector<4x256xf32>
    %49 = vector.shape_cast %46 : vector<4x256xf32> to vector<1x1x4x256xf32>
    tpu.vector_store %arg4[%c0_37, %c3_38, %c0_39, %c0_40], %49 {strides = array<i32>} : memref<1x5x4x256xf32, #tpu.memory_space<vmem>>, vector<1x1x4x256xf32>,
    %c0_41 = arith.constant 0 : index
    %c4 = arith.constant 4 : index
    %c0_42 = arith.constant 0 : index
    %c0_43 = arith.constant 0 : index
    %50 = vector.load %arg4[%c0_41, %c4, %c0_42, %c0_43] : memref<1x5x4x256xf32, #tpu.memory_space<vmem>>, vector<1x1x4x256xf32>
    %51 = vector.shape_cast %50 : vector<1x1x4x256xf32> to vector<4x256xf32>
    %cst_44 = arith.constant dense<0.000000e+00> : vector<4x256xf32>
    %52 = vector.multi_reduction <add>, %19, %cst_44 [0] : vector<2x4x256xf32> to vector<4x256xf32>
    %53 = arith.addf %51, %52 : vector<4x256xf32>
    %c0_45 = arith.constant 0 : index
    %c4_46 = arith.constant 4 : index
    %c0_47 = arith.constant 0 : index
    %c0_48 = arith.constant 0 : index
    %54 = vector.load %arg4[%c0_45, %c4_46, %c0_47, %c0_48] : memref<1x5x4x256xf32, #tpu.memory_space<vmem>>, vector<1x1x4x256xf32>
    %55 = vector.shape_cast %54 : vector<1x1x4x256xf32> to vector<4x256xf32>
    %56 = vector.shape_cast %53 : vector<4x256xf32> to vector<1x1x4x256xf32>
    tpu.vector_store %arg4[%c0_45, %c4_46, %c0_47, %c0_48], %56 {strides = array<i32>} : memref<1x5x4x256xf32, #tpu.memory_space<vmem>>, vector<1x1x4x256xf32>,
    return
  }
  func.func @transform_0(%arg0: i32, %arg1: i32) -> (i32, i32, i32) {
    %c1_i32 = arith.constant 1 : i32
    %0 = arith.muli %arg0, %c1_i32 : i32
    %1 = arith.addi %0, %arg1 : i32
    %c0_i32 = arith.constant 0 : i32
    %c0_i32_0 = arith.constant 0 : i32
    %c0_i32_1 = arith.constant 0 : i32
    return %c0_i32, %c0_i32_0, %1 : i32, i32, i32
  }
  func.func @transform_1(%arg0: i32, %arg1: i32) -> (i32, i32, i32) {
    %c1_i32 = arith.constant 1 : i32
    %0 = arith.muli %arg0, %c1_i32 : i32
    %1 = arith.addi %0, %arg1 : i32
    %c0_i32 = arith.constant 0 : i32
    %c0_i32_0 = arith.constant 0 : i32
    %c0_i32_1 = arith.constant 0 : i32
    return %c0_i32, %c0_i32_0, %1 : i32, i32, i32
  }
  func.func @transform_2(%arg0: i32, %arg1: i32) -> (i32, i32, i32, i32) {
    %c0_i32 = arith.constant 0 : i32
    %c0_i32_0 = arith.constant 0 : i32
    %c0_i32_1 = arith.constant 0 : i32
    %c0_i32_2 = arith.constant 0 : i32
    return %arg0, %c0_i32, %c0_i32_0, %c0_i32_1 : i32, i32, i32, i32
  }
}

</mosaic_0001>

<llo_original>
// kernel: jaccard_mcc_loss.1
$region0: #{jaccard_mcc_loss.1}
  #allocation0 [shape = 'u32[]', space=smem, size = 0x4, offset = 0x4, fixed_abs, tag = 'smem constant byte address 0x4 - core index']
  #allocation1 [shape = 'u32[144,128]{1,0:T(1,128)}', space=vmem, size = 0x12000, scoped, tag = 'internal scratch']
  %s0 = inlined_call_operand.vmem [shape: f32[2,4,256], index: 0, kind: input, shape index: {}]
  %s1 = inlined_call_operand.vmem [shape: f32[2,4,256], index: 1, kind: input, shape index: {}]
  %s2 = inlined_call_operand.vmem [shape: f32[1,5,4,256], index: 2, kind: output, shape index: {}]
  %s3 = sld [smem:[#allocation0]]
  $region22: #{jaccard_mcc_loss.1} parent=0
    _
  %s5 = ssub.s32 1, %s3
  %s6 = scalar_select 0, %s5, %s3
  // Predicated region
  $region2: #{jaccard_mcc_loss.1} parent=0 // pred_check
    _
  $region3: #{jaccard_mcc_loss.1} parent=0 // pred_check_branch
    %8 = sbr.rel (0) target = $region5
  $region4: #{jaccard_mcc_loss.1} parent=0 // pred_region
    %s9 = sadd.s32 0, 0
    %s10 = smul.u32 2, %s9
    %p11 = scmp.lt.s32.totalorder %s10, 1
    %s12 = scalar_select %p11, %s10, 1
    %s13 = smul.addr %s12, 4
    %s14 = scalar_lea.vmem %s0, %s13
    %s15 = sadd.s32 0, 0
    %s16 = smul.u32 2, %s15
  $region5: #{jaccard_mcc_loss.1} parent=0 // pred_fallthru
    _
  // Predicated region
  $region6: #{jaccard_mcc_loss.1} parent=0 // pred_check
    _
  $region7: #{jaccard_mcc_loss.1} parent=0 // pred_check_branch
    %18 = sbr.rel (0) target = $region9
  $region8: #{jaccard_mcc_loss.1} parent=0 // pred_region
    %s19 = sadd.s32 0, 0
    %s20 = smul.u32 2, %s19
    %p21 = scmp.lt.s32.totalorder %s20, 1
    %s22 = scalar_select %p21, %s20, 1
    %s23 = smul.addr %s22, 4
    %s24 = scalar_lea.vmem %s1, %s23
    %s25 = sadd.s32 0, 0
    %s26 = smul.u32 2, %s25
  $region9: #{jaccard_mcc_loss.1} parent=0 // pred_fallthru
    _
  %s27 = sadd.s32 0, 0
  %s28 = smul.u32 2, %s27
  %p29 = scmp.lt.s32.totalorder %s28, 1
  %s30 = scalar_select %p29, %s28, 1
  %s31 = smul.addr %s30, 4
  %s32 = scalar_lea.vmem %s0, %s31
  %s33 = sadd.s32 0, 0
  %s34 = smul.u32 2, %s33
  %p35 = scmp.lt.s32.totalorder %s34, 1
  %s36 = scalar_select %p35, %s34, 1
  %s37 = smul.addr %s36, 4
  %s38 = scalar_lea.vmem %s1, %s37
  %s39 = sadd.s32 0, 0
  %s40 = smul.u32 2, %s39
  %p41 = scmp.lt.s32.totalorder %s40, 1
  %s42 = scalar_select %p41, %s40, 1
  %s43 = smul.addr %s42, 4
  %s44 = scalar_lea.vmem %s0, %s43
  %s45 = sadd.s32 0, 0
  %s46 = smul.u32 2, %s45
  %s47 = sadd.s32 0, 0
  %s48 = smul.u32 2, %s47
  %p49 = scmp.lt.s32.totalorder %s48, 1
  %s50 = scalar_select %p49, %s48, 1
  %s51 = smul.addr %s50, 4
  %s52 = scalar_lea.vmem %s1, %s51
  %s53 = sadd.s32 0, 0
  %s54 = smul.u32 2, %s53
  %p55 = scmp.eq.s32.totalorder 0, 0
  // Predicated region
  $region10: #{jaccard_mcc_loss.1} parent=0 // pred_check
    %p56 = pneg %p55
  $region11: #{jaccard_mcc_loss.1} parent=0 // pred_check_branch
    %58 = sbr.rel (%p56) target = $region13
  $region12: #{jaccard_mcc_loss.1} parent=0 // pred_region
    %59 = vst [vmem:[%s2] sm:$0xff] 0.0
    %60 = vst [vmem:[%s2 + $0x8] sm:$0xff] 0.0
    %61 = vst [vmem:[%s2 + $0x10] sm:$0xff] 0.0
    %62 = vst [vmem:[%s2 + $0x18] sm:$0xff] 0.0
    %63 = vst [vmem:[%s2 + $0x20] sm:$0xff] 0.0
  $region13: #{jaccard_mcc_loss.1} parent=0 // pred_fallthru
    _
  %v64 = vld [vmem:[%s44] sm:$0xff]
  %v65 = vld [vmem:[%s44 + $0x8] sm:$0xff]
  %v66 = vld [vmem:[%s52] sm:$0xff]
  %v67 = vld [vmem:[%s52 + $0x8] sm:$0xff]
  %v70 = vcombine.high %v64, %v64
  %v71 = vcombine.high %v65, %v65
  %vm74 = vcmask 1043456
  %v75 = vsel %vm74, %v64, -inf
  %v76 = vrot.slane %v75, 4
  %v77 = vmax.f32 %v75, %v76
  %v78 = vrot.slane %v77, 2
  %v79 = vmax.f32 %v77, %v78
  %v80 = vrot.slane %v79, 1
  %v81 = vmax.f32 %v79, %v80
  %v82 = vsel %vm74, %v70, -inf
  %v83 = vrot.slane %v82, 4
  %v84 = vmax.f32 %v82, %v83
  %v85 = vrot.slane %v84, 2
  %v86 = vmax.f32 %v84, %v85
  %v87 = vrot.slane %v86, 1
  %v88 = vmax.f32 %v86, %v87
  %v89 = vsel %vm74, %v65, -inf
  %v90 = vrot.slane %v89, 4
  %v91 = vmax.f32 %v89, %v90
  %v92 = vrot.slane %v91, 2
  %v93 = vmax.f32 %v91, %v92
  %v94 = vrot.slane %v93, 1
  %v95 = vmax.f32 %v93, %v94
  %v96 = vsel %vm74, %v71, -inf
  %v97 = vrot.slane %v96, 4
  %v98 = vmax.f32 %v96, %v97
  %v99 = vrot.slane %v98, 2
  %v100 = vmax.f32 %v98, %v99
  %v101 = vrot.slane %v100, 1
  %v102 = vmax.f32 %v100, %v101
  %v107 = vcombine.low %v81, %v88
  %v108 = vcombine.low %v95, %v102
  %v111 = vsub.f32 %v64, %v107
  %v112 = vsub.f32 %v65, %v108
  %v113 = vmul.f32 %v111, 1.442695
  %v114 = vpow.pop %v113
  %v115 = vmul.f32 %v112, 1.442695
  %v116 = vpow.pop %v115
  %v119 = vcombine.high %v114, %v114
  %v120 = vcombine.high %v116, %v116
  %v123 = vsel %vm74, %v114, 0.0
  %v124 = vrot.slane %v123, 4
  %v125 = vadd.f32 %v123, %v124
  %v126 = vrot.slane %v125, 2
  %v127 = vadd.f32 %v125, %v126
  %v128 = vrot.slane %v127, 1
  %v129 = vadd.f32 %v127, %v128
  %v130 = vsel %vm74, %v119, 0.0
  %v131 = vrot.slane %v130, 4
  %v132 = vadd.f32 %v130, %v131
  %v133 = vrot.slane %v132, 2
  %v134 = vadd.f32 %v132, %v133
  %v135 = vrot.slane %v134, 1
  %v136 = vadd.f32 %v134, %v135
  %v137 = vsel %vm74, %v116, 0.0
  %v138 = vrot.slane %v137, 4
  %v139 = vadd.f32 %v137, %v138
  %v140 = vrot.slane %v139, 2
  %v141 = vadd.f32 %v139, %v140
  %v142 = vrot.slane %v141, 1
  %v143 = vadd.f32 %v141, %v142
  %v144 = vsel %vm74, %v120, 0.0
  %v145 = vrot.slane %v144, 4
  %v146 = vadd.f32 %v144, %v145
  %v147 = vrot.slane %v146, 2
  %v148 = vadd.f32 %v146, %v147
  %v149 = vrot.slane %v148, 1
  %v150 = vadd.f32 %v148, %v149
  %v151 = vrcp.pop %v129
  %v152 = vrcp.pop %v136
  %v153 = vrcp.pop %v143
  %v154 = vrcp.pop %v150
  %v159 = vcombine.low %v151, %v152
  %v160 = vcombine.low %v153, %v154
  %v163 = vmul.f32 %v114, %v159
  %v164 = vmul.f32 %v116, %v160
  %v165 = vxor.u32 %v163, 2147483648
  %v166 = vxor.u32 %v164, 2147483648
  %v167 = vmul.f32 %v165, 1.442695
  %v168 = vpow.pop %v167
  %v169 = vmul.f32 %v166, 1.442695
  %v170 = vpow.pop %v169
  %v171 = vadd.f32 %v168, 1.0
  %v172 = vadd.f32 %v170, 1.0
  %v173 = vrcp.pop %v171
  %v174 = vmul.f32 1.0, %v173
  %v175 = vrcp.pop %v172
  %v176 = vmul.f32 1.0, %v175
  %v177 = vld [vmem:[%s2] sm:$0xff]
  %v178 = vmul.f32 %v163, %v66
  %v179 = vmul.f32 %v164, %v67
  %v182 = vcombine.high %v178, %v178
  %v183 = vcombine.high %v179, %v179
  %v186 = vsel %vm74, %v178, 0.0
  %v187 = vsel %vm74, %v179, 0.0
  %v188 = vadd.f32 %v186, %v187
  %v189 = vsel %vm74, %v182, 0.0
  %v190 = vsel %vm74, %v183, 0.0
  %v191 = vadd.f32 %v189, %v190
  %v194 = vcombine.low %v188, %v191
  %v196 = vadd.f32 %v177, %v194
  %197 = vst [vmem:[%s2] sm:$0xff] %v196
  %s198 = scalar_lea.vmem %s2, 8
  %v199 = vld [vmem:[%s198] sm:$0xff]
  %v202 = vcombine.high %v163, %v163
  %v203 = vcombine.high %v164, %v164
  %v206 = vsel %vm74, %v163, 0.0
  %v207 = vsel %vm74, %v164, 0.0
  %v208 = vadd.f32 %v206, %v207
  %v209 = vsel %vm74, %v202, 0.0
  %v210 = vsel %vm74, %v203, 0.0
  %v211 = vadd.f32 %v209, %v210
  %v214 = vcombine.low %v208, %v211
  %v216 = vadd.f32 %v199, %v214
  %217 = vst [vmem:[%s198] sm:$0xff] %v216
  %s218 = scalar_lea.vmem %s2, 16
  %v219 = vld [vmem:[%s218] sm:$0xff]
  %v222 = vcombine.high %v66, %v66
  %v223 = vcombine.high %v67, %v67
  %v226 = vsel %vm74, %v66, 0.0
  %v227 = vsel %vm74, %v67, 0.0
  %v228 = vadd.f32 %v226, %v227
  %v229 = vsel %vm74, %v222, 0.0
  %v230 = vsel %vm74, %v223, 0.0
  %v231 = vadd.f32 %v229, %v230
  %v234 = vcombine.low %v228, %v231
  %v236 = vadd.f32 %v219, %v234
  %237 = vst [vmem:[%s218] sm:$0xff] %v236
  %s238 = scalar_lea.vmem %s2, 24
  %v239 = vld [vmem:[%s238] sm:$0xff]
  %v240 = vmul.f32 %v174, %v66
  %v241 = vmul.f32 %v176, %v67
  %v244 = vcombine.high %v240, %v240
  %v245 = vcombine.high %v241, %v241
  %v248 = vsel %vm74, %v240, 0.0
  %v249 = vsel %vm74, %v241, 0.0
  %v250 = vadd.f32 %v248, %v249
  %v251 = vsel %vm74, %v244, 0.0
  %v252 = vsel %vm74, %v245, 0.0
  %v253 = vadd.f32 %v251, %v252
  %v256 = vcombine.low %v250, %v253
  %v258 = vadd.f32 %v239, %v256
  %259 = vst [vmem:[%s238] sm:$0xff] %v258
  %s260 = scalar_lea.vmem %s2, 32
  %v261 = vld [vmem:[%s260] sm:$0xff]
  %v264 = vcombine.high %v174, %v174
  %v265 = vcombine.high %v176, %v176
  %v268 = vsel %vm74, %v174, 0.0
  %v269 = vsel %vm74, %v176, 0.0
  %v270 = vadd.f32 %v268, %v269
  %v271 = vsel %vm74, %v264, 0.0
  %v272 = vsel %vm74, %v265, 0.0
  %v273 = vadd.f32 %v271, %v272
  %v276 = vcombine.low %v270, %v273
  %v278 = vadd.f32 %v261, %v276
  %279 = vst [vmem:[%s260] sm:$0xff] %v278
  // Predicated region
  $region14: #{jaccard_mcc_loss.1} parent=0 // pred_check
    _
  $region15: #{jaccard_mcc_loss.1} parent=0 // pred_check_branch
    %281 = sbr.rel (0) target = $region17
  $region16: #{jaccard_mcc_loss.1} parent=0 // pred_region
    _
  $region17: #{jaccard_mcc_loss.1} parent=0 // pred_fallthru
    _
  // Predicated region
  $region18: #{jaccard_mcc_loss.1} parent=0 // pred_check
    _
  $region19: #{jaccard_mcc_loss.1} parent=0 // pred_check_branch
    %283 = sbr.rel (0) target = $region21
  $region20: #{jaccard_mcc_loss.1} parent=0 // pred_region
    _
  $region21: #{jaccard_mcc_loss.1} parent=0 // pred_fallthru
    _

</llo_original>
